<compile_context>
chip_gen: v7x
topology: tpu7x:2x2x1
jax: 0.10.0
libtpu: 0.0.40
codegen_flags: <defaults>
</compile_context>

<pallas_src>
import functools

import jax
import jax.numpy as jnp
from jax.experimental import pallas as pl
from jax.experimental.pallas import tpu as pltpu


def _round_up(x, m):
    return (x + m - 1) // m * m


def _vmem_budget_bytes():
    cap = 64 * 1024 * 1024  # conservative fallback (v7x per-TC VMEM)
    try:
        cap = int(getattr(pltpu.get_tpu_info(), "vmem_capacity_bytes", cap))
    except Exception:
        pass
    # ~75% of physical, capped: -> ~48 MiB on v7x, ~96 MiB on v5e/v6e.
    return min(cap * 3 // 4, 100 * 1024 * 1024)


# ---------------------------------------------------------------------------
# Kernel helpers
# ---------------------------------------------------------------------------
_NEG_INIT = -1.0e30  # finite "-inf" sentinel for the running max


def _init_scratch(m_run, l_run, s_cnt, s_sim):
    m_run[...] = jnp.full(m_run.shape, _NEG_INIT, jnp.float32)
    l_run[...] = jnp.zeros(l_run.shape, jnp.float32)
    s_cnt[...] = jnp.zeros(s_cnt.shape, jnp.float32)
    s_sim[...] = jnp.zeros(s_sim.shape, jnp.float32)


def _online_update(sim, pos, m_run, l_run, s_cnt, s_sim):
    """Flash-style accumulation over one [TA, TN] block of contrast columns."""
    m_prev = m_run[...]
    m_new = jnp.maximum(m_prev, jnp.max(sim, axis=1, keepdims=True))
    l_run[...] = (jnp.exp(m_prev - m_new) * l_run[...]
                  + jnp.sum(jnp.exp(sim - m_new), axis=1, keepdims=True))
    m_run[...] = m_new
    # Positive-pair sums are shift-free (the row max cancels exactly in the
    # forward value), so no rescaling is needed here.
    s_cnt[...] += jnp.sum(pos, axis=1, keepdims=True)
    s_sim[...] += jnp.sum(pos * sim, axis=1, keepdims=True)


def _finalize(a_ref, diag, out_ref, m_run, l_run, s_cnt, s_sim, *,
              inv_temperature, loss_scale, n_pad_cols):
    # Self-contrast logit, recomputed from the same bf16 anchor tile the MXU
    # consumed (bf16*bf16 products are exact in f32; only summation order can
    # differ from the MXU by ~1 ulp).
    a32 = a_ref[...].astype(jnp.float32)
    self_sim = jnp.sum(a32 * a32, axis=1, keepdims=True) * inv_temperature
    m_f = m_run[...]
    # Algebraic logits-mask: drop the self column and the zero-padded contrast
    # columns (their sim is exactly 0) from the softmax denominator.
    denom = (l_run[...] - jnp.exp(self_sim - m_f)
             - jnp.float32(n_pad_cols) * jnp.exp(-m_f))
    log_denom = m_f + jnp.log(jnp.maximum(denom, jnp.float32(1e-37)))
    # Drop the self column from the positive-pair sums (diag = 1 for the
    # labels/SimCLR paths, user-mask diagonal for the mask path).
    cnt = s_cnt[...] - diag
    ssum = s_sim[...] - diag * self_sim
    cnt_safe = jnp.where(cnt < 1e-6, jnp.float32(1.0), cnt)
    mean_log_prob_pos = (ssum - log_denom * cnt) / cnt_safe  # exact divide
    out_ref[...] = -loss_scale * mean_log_prob_pos


# ---------------------------------------------------------------------------
# Kernels
# ---------------------------------------------------------------------------
def _supcon_labels_kernel(la_ref, ln_ref, a_ref, ct_ref, out_ref,
                          m_run, l_run, s_cnt, s_sim, *,
                          inv_temperature, loss_scale, n_pad_cols):
    # la_ref: [TA, 1] int32    anchor labels (constant over the kn axis)
    # ln_ref: [1, TN] int32    contrast labels tile
    # a_ref:  [TA, D] bf16     anchor features (constant over the kn axis)
    # ct_ref: [D, TN] bf16     transposed contrast features tile
    # out_ref:[TA, 1] f32      per-anchor loss (written at the last kn step)
    kn = pl.program_id(1)

    @pl.when(kn == 0)
    def _():
        _init_scratch(m_run, l_run, s_cnt, s_sim)

    sim = jnp.dot(a_ref[...], ct_ref[...],
                  preferred_element_type=jnp.float32) * inv_temperature
    pos = (la_ref[...] == ln_ref[...]).astype(jnp.float32)  # [TA, TN]
    _online_update(sim, pos, m_run, l_run, s_cnt, s_sim)

    @pl.when(kn == pl.num_programs(1) - 1)
    def _():
        _finalize(a_ref, jnp.float32(1.0), out_ref, m_run, l_run, s_cnt, s_sim,
                  inv_temperature=inv_temperature, loss_scale=loss_scale,
                  n_pad_cols=n_pad_cols)


def _supcon_mask_kernel(mdiag_ref, m_ref, a_ref, ct_ref, out_ref,
                        m_run, l_run, s_cnt, s_sim, *,
                        inv_temperature, loss_scale, n_pad_cols):
    # Fallback for a user-supplied [bsz, bsz] mask (cannot be rebuilt from
    # labels). m_ref: [TA, TN] bf16 tile of the tiled/padded positives mask;
    # mdiag_ref: [TA, 1] f32 diagonal of the tiled mask (self-column value).
    kn = pl.program_id(1)

    @pl.when(kn == 0)
    def _():
        _init_scratch(m_run, l_run, s_cnt, s_sim)

    sim = jnp.dot(a_ref[...], ct_ref[...],
                  preferred_element_type=jnp.float32) * inv_temperature
    pos = m_ref[...].astype(jnp.float32)
    _online_update(sim, pos, m_run, l_run, s_cnt, s_sim)

    @pl.when(kn == pl.num_programs(1) - 1)
    def _():
        _finalize(a_ref, mdiag_ref[...], out_ref, m_run, l_run, s_cnt, s_sim,
                  inv_temperature=inv_temperature, loss_scale=loss_scale,
                  n_pad_cols=n_pad_cols)


# ---------------------------------------------------------------------------
# Wrapper
# ---------------------------------------------------------------------------
def supcon_loss(features, labels=None, mask=None, *,
                temperature=0.07, contrast_mode='all', base_temperature=0.07,
                tile_a=None, tile_n=None):
    """JAX/Pallas port of SupConLoss.forward (forward value only)."""
    if features.ndim < 3:
        raise ValueError('`features` needs to be [bsz, n_views, ...], '
                         'at least 3 dimensions are required')
    if features.ndim > 3:
        features = features.reshape(features.shape[0], features.shape[1], -1)
    if labels is not None and mask is not None:
        raise ValueError('Cannot define both `labels` and `mask`')

    features = features.astype(jnp.float32)
    bsz, n_views, dim = features.shape
    contrast_count = n_views

    # torch.cat(torch.unbind(features, dim=1), dim=0): view-major stacking.
    contrast_feature = jnp.transpose(features, (1, 0, 2)).reshape(
        n_views * bsz, dim)

    if contrast_mode == 'one':
        anchor_feature = features[:, 0]
        anchor_count = 1
    elif contrast_mode == 'all':
        anchor_feature = contrast_feature
        anchor_count = contrast_count
    else:
        raise ValueError('Unknown mode: {}'.format(contrast_mode))

    A = anchor_count * bsz          # number of anchors
    N = contrast_count * bsz        # number of contrast samples

    # ---- Per-generation tiling --------------------------------------------
    budget = _vmem_budget_bytes()
    big_vmem = budget >= 80 * 1024 * 1024       # v5e / v6e (128 MiB physical)

    A16 = _round_up(A, 16)                      # bf16 sublane packing
    ta_max = int(tile_a) if tile_a is not None else (512 if big_vmem else 256)
    TA = min(_round_up(ta_max, 16), A16)
    if TA >= A16 and A16 >= 256:
        # Keep >=2 steps on the "parallel" axis so v7x's 2nd TensorCore gets
        # work (single extra pipeline step is harmless on v5e/v6e).
        TA = max(128, _round_up((A16 + 1) // 2, 16))
    Ap = _round_up(A16, TA)

    tn_max = int(tile_n) if tile_n is not None else (2048 if big_vmem else 1024)
    tn_max = max(128, _round_up(tn_max, 128))
    Np0 = _round_up(N, 128)
    nk = -(-Np0 // tn_max)                      # number of contrast-column tiles
    TN = _round_up(-(-Np0 // nk), 128)          # minimal-padding tile width
    Np = TN * nk

    grid = (Ap // TA, nk)

    # bf16 features for the MXU; contrast pre-transposed to [D, Np].
    anchor_p = jnp.zeros((Ap, dim), jnp.bfloat16).at[:A].set(
        anchor_feature.astype(jnp.bfloat16))
    contrast_t = jnp.zeros((dim, Np), jnp.bfloat16).at[:, :N].set(
        contrast_feature.astype(jnp.bfloat16).T)

    out_shape = jax.ShapeDtypeStruct((Ap, 1), jnp.float32)
    out_spec = pl.BlockSpec((TA, 1), lambda i, kn: (i, 0))
    scratch = [pltpu.VMEM((TA, 1), jnp.float32)] * 4   # m, l, count, sum(pos*sim)
    compiler_params = pltpu.CompilerParams(
        dimension_semantics=("parallel", "arbitrary"),
        vmem_limit_bytes=budget)

    kernel_kwargs = dict(
        inv_temperature=1.0 / float(temperature),
        loss_scale=float(temperature) / float(base_temperature),
        n_pad_cols=int(Np - N))

    if mask is None:
        # SimCLR (eye mask) is exactly labels == arange(bsz).
        if labels is None:
            labels_base = jnp.arange(bsz, dtype=jnp.int32)
        else:
            labels_base = jnp.asarray(labels).reshape(-1).astype(jnp.int32)
            if labels_base.shape[0] != bsz:
                raise ValueError('Num of labels does not match num of features')
        labels_a = jnp.tile(labels_base, anchor_count)    # [A]
        labels_n = jnp.tile(labels_base, contrast_count)  # [N]
        # Distinct sentinels: padded rows/cols never match anything real.
        s1 = jnp.iinfo(jnp.int32).min + 1
        s2 = jnp.iinfo(jnp.int32).min + 2
        la = jnp.full((Ap, 1), s1, jnp.int32).at[:A, 0].set(labels_a)
        ln = jnp.full((1, Np), s2, jnp.int32).at[0, :N].set(labels_n)

        kernel = functools.partial(_supcon_labels_kernel, **kernel_kwargs)
        in_specs = [
            pl.BlockSpec((TA, 1), lambda i, kn: (i, 0)),     # anchor labels
            pl.BlockSpec((1, TN), lambda i, kn: (0, kn)),    # contrast labels tile
            pl.BlockSpec((TA, dim), lambda i, kn: (i, 0)),   # anchor features
            pl.BlockSpec((dim, TN), lambda i, kn: (0, kn)),  # contrast^T tile
        ]
        args = (la, ln, anchor_p, contrast_t)
    else:
        # TODO(synk): stream the [bsz, N] base mask with a modulo row index_map
        # instead of materializing the anchor_count-fold tiled copy in HBM.
        base_mask = jnp.asarray(mask, jnp.float32)
        full_mask = jnp.tile(base_mask, (anchor_count, contrast_count))  # [A, N]
        mask_p = jnp.zeros((Ap, Np), jnp.bfloat16).at[:A, :N].set(
            full_mask.astype(jnp.bfloat16))
        mdiag = jnp.tile(jnp.diagonal(base_mask), anchor_count)          # [A]
        mdiag_p = jnp.zeros((Ap, 1), jnp.float32).at[:A, 0].set(mdiag)

        kernel = functools.partial(_supcon_mask_kernel, **kernel_kwargs)
        in_specs = [
            pl.BlockSpec((TA, 1), lambda i, kn: (i, 0)),     # mask diagonal
            pl.BlockSpec((TA, TN), lambda i, kn: (i, kn)),   # positives mask tile
            pl.BlockSpec((TA, dim), lambda i, kn: (i, 0)),   # anchor features
            pl.BlockSpec((dim, TN), lambda i, kn: (0, kn)),  # contrast^T tile
        ]
        args = (mdiag_p, mask_p, anchor_p, contrast_t)

    per_anchor = pl.pallas_call(
        kernel,
        out_shape=out_shape,
        grid_spec=pltpu.PrefetchScalarGridSpec(
            num_scalar_prefetch=0,
            grid=grid,
            in_specs=in_specs,
            out_specs=out_spec,
            scratch_shapes=scratch),
        compiler_params=compiler_params,
    )(*args)

    # loss.view(anchor_count, bsz).mean() == mean over all A anchors.
    return jnp.mean(per_anchor[:A, 0])
    # TODO(synk): pallas_call is not auto-differentiable; wrap in jax.custom_vjp
    # if gradients are needed.


# ---------------------------------------------------------------------------
# Pure-JAX reference (mirrors the PyTorch module) for a sanity check.
# ---------------------------------------------------------------------------
def _supcon_ref(features, labels=None, mask=None, *,
                temperature=0.07, contrast_mode='all', base_temperature=0.07):
    features = features.astype(jnp.float32)
    bsz, n_views, dim = features.shape
    if labels is None and mask is None:
        mask = jnp.eye(bsz, dtype=jnp.float32)
    elif labels is not None:
        lab = jnp.asarray(labels).reshape(-1, 1)
        mask = (lab == lab.T).astype(jnp.float32)
    else:
        mask = jnp.asarray(mask, jnp.float32)
    contrast_count = n_views
    contrast_feature = jnp.transpose(features, (1, 0, 2)).reshape(n_views * bsz, dim)
    if contrast_mode == 'one':
        anchor_feature, anchor_count = features[:, 0], 1
    else:
        anchor_feature, anchor_count = contrast_feature, contrast_count
    logits = anchor_feature @ contrast_feature.T / temperature
    logits = logits - jnp.max(logits, axis=1, keepdims=True)
    mask = jnp.tile(mask, (anchor_count, contrast_count))
    A, N = anchor_count * bsz, contrast_count * bsz
    logits_mask = 1.0 - jnp.eye(A, N, dtype=jnp.float32)
    mask = mask * logits_mask
    exp_logits = jnp.exp(logits) * logits_mask
    log_prob = logits - jnp.log(jnp.sum(exp_logits, axis=1, keepdims=True))
    mpp = jnp.sum(mask, axis=1)
    mpp = jnp.where(mpp < 1e-6, 1.0, mpp)
    mlpp = jnp.sum(mask * log_prob, axis=1) / mpp
    return jnp.mean(-(temperature / base_temperature) * mlpp)


if __name__ == "__main__":
    key = jax.random.PRNGKey(0)
    k_feat, k_lab = jax.random.split(key)

    bsz, n_views, dim = 8, 2, 32
    features = jax.random.normal(k_feat, (bsz, n_views, dim), dtype=jnp.float32)
    features = features / jnp.linalg.norm(features, axis=-1, keepdims=True)
    labels = jax.random.randint(k_lab, (bsz,), 0, 4)
    explicit_mask = (labels[:, None] == labels[None, :]).astype(jnp.float32)

    # Reference on bf16-quantized features (the kernel feeds the MXU in bf16).
    feat_q = features.astype(jnp.bfloat16).astype(jnp.float32)

    cases = [
        dict(labels=labels),                       # supervised
        dict(),                                    # SimCLR
        dict(labels=labels, contrast_mode='one'),  # 'one' anchor mode
        dict(mask=explicit_mask),                  # explicit-mask fallback
    ]
    for kw in cases:
        got = supcon_loss(features, **kw)
        want = _supcon_ref(feat_q, **kw)
        jax.block_until_ready(got)
        assert bool(jnp.isfinite(got)), kw
        assert abs(float(got) - float(want)) <= 5e-3 + 5e-3 * abs(float(want)), (
            kw, float(got), float(want))

    print("KERNEL_OK")
</pallas_src>

<mosaic_0001>
module attributes {stable_mosaic.version = 11 : i64} {
  func.func @_supcon_labels_kernel(%arg0: i32, %arg1: i32, %arg2: memref<16x1xi32, #tpu.memory_space<vmem>>, %arg3: memref<1x128xi32, #tpu.memory_space<vmem>>, %arg4: memref<16x32xbf16, #tpu.memory_space<vmem>>, %arg5: memref<32x128xbf16, #tpu.memory_space<vmem>>, %arg6: memref<16x1xf32, #tpu.memory_space<vmem>>, %arg7: memref<16x1xf32, #tpu.memory_space<vmem>>, %arg8: memref<16x1xf32, #tpu.memory_space<vmem>>, %arg9: memref<16x1xf32, #tpu.memory_space<vmem>>, %arg10: memref<16x1xf32, #tpu.memory_space<vmem>>) attributes {dimension_semantics = [#tpu.dimension_semantics<parallel>, #tpu.dimension_semantics<arbitrary>], iteration_bounds = array<i64: 1, 1>, scalar_prefetch = 0 : i64, scratch_operands = 4 : i64, tpu.core_type = #tpu.core_type<tc>, window_params = [{transform_indices = @transform_0, window_bounds = array<i64: 16, 1>}, {transform_indices = @transform_1, window_bounds = array<i64: 1, 128>}, {transform_indices = @transform_2, window_bounds = array<i64: 16, 32>}, {transform_indices = @transform_3, window_bounds = array<i64: 32, 128>}, {transform_indices = @transform_4, window_bounds = array<i64: 16, 1>}]} {
    %c0_i32 = arith.constant 0 : i32
    %0 = arith.cmpi eq, %arg1, %c0_i32 : i32
    %1 = arith.extui %0 : i1 to i32
    %c0_i32_0 = arith.constant 0 : i32
    %2 = arith.cmpi ne, %1, %c0_i32_0 : i32
    scf.if %2 {
      %cst_31 = arith.constant -1.000000e+30 : f32
      %45 = vector.broadcast %cst_31 : f32 to vector<16x1xf32>
      %c0_32 = arith.constant 0 : index
      %c0_33 = arith.constant 0 : index
      %46 = vector.load %arg7[%c0_32, %c0_33] : memref<16x1xf32, #tpu.memory_space<vmem>>, vector<16x1xf32>
      tpu.vector_store %arg7[%c0_32, %c0_33], %45 {strides = array<i32>} : memref<16x1xf32, #tpu.memory_space<vmem>>, vector<16x1xf32>,
      %cst_34 = arith.constant 0.000000e+00 : f32
      %47 = vector.broadcast %cst_34 : f32 to vector<16x1xf32>
      %c0_35 = arith.constant 0 : index
      %c0_36 = arith.constant 0 : index
      %48 = vector.load %arg8[%c0_35, %c0_36] : memref<16x1xf32, #tpu.memory_space<vmem>>, vector<16x1xf32>
      tpu.vector_store %arg8[%c0_35, %c0_36], %47 {strides = array<i32>} : memref<16x1xf32, #tpu.memory_space<vmem>>, vector<16x1xf32>,
      %cst_37 = arith.constant 0.000000e+00 : f32
      %49 = vector.broadcast %cst_37 : f32 to vector<16x1xf32>
      %c0_38 = arith.constant 0 : index
      %c0_39 = arith.constant 0 : index
      %50 = vector.load %arg9[%c0_38, %c0_39] : memref<16x1xf32, #tpu.memory_space<vmem>>, vector<16x1xf32>
      tpu.vector_store %arg9[%c0_38, %c0_39], %49 {strides = array<i32>} : memref<16x1xf32, #tpu.memory_space<vmem>>, vector<16x1xf32>,
      %cst_40 = arith.constant 0.000000e+00 : f32
      %51 = vector.broadcast %cst_40 : f32 to vector<16x1xf32>
      %c0_41 = arith.constant 0 : index
      %c0_42 = arith.constant 0 : index
      %52 = vector.load %arg10[%c0_41, %c0_42] : memref<16x1xf32, #tpu.memory_space<vmem>>, vector<16x1xf32>
      tpu.vector_store %arg10[%c0_41, %c0_42], %51 {strides = array<i32>} : memref<16x1xf32, #tpu.memory_space<vmem>>, vector<16x1xf32>,
    } else {
    }
    %c0 = arith.constant 0 : index
    %c0_1 = arith.constant 0 : index
    %3 = vector.load %arg4[%c0, %c0_1] : memref<16x32xbf16, #tpu.memory_space<vmem>>, vector<16x32xbf16>
    %c0_2 = arith.constant 0 : index
    %c0_3 = arith.constant 0 : index
    %4 = vector.load %arg5[%c0_2, %c0_3] : memref<32x128xbf16, #tpu.memory_space<vmem>>, vector<32x128xbf16>
    %cst = arith.constant dense<0.000000e+00> : vector<16x128xf32>
    %5 = tpu.matmul %3, %4, %cst {dimension_numbers = #tpu.dot_dimension_numbers<[1], [0], [0], [1], [0, 0, 1, 1], [], []>} : vector<16x32xbf16>, vector<32x128xbf16>, vector<16x128xf32> -> vector<16x128xf32>
    %cst_4 = arith.constant 14.2857141 : f32
    %6 = vector.broadcast %cst_4 : f32 to vector<16x128xf32>
    %7 = arith.mulf %5, %6 : vector<16x128xf32>
    %c0_5 = arith.constant 0 : index
    %c0_6 = arith.constant 0 : index
    %8 = vector.load %arg2[%c0_5, %c0_6] : memref<16x1xi32, #tpu.memory_space<vmem>>, vector<16x1xi32>
    %c0_7 = arith.constant 0 : index
    %c0_8 = arith.constant 0 : index
    %9 = vector.load %arg3[%c0_7, %c0_8] : memref<1x128xi32, #tpu.memory_space<vmem>>, vector<1x128xi32>
    %10 = vector.broadcast %8 : vector<16x1xi32> to vector<16x128xi32>
    %11 = vector.broadcast %9 : vector<1x128xi32> to vector<16x128xi32>
    %12 = arith.cmpi eq, %10, %11 : vector<16x128xi32>
    %13 = arith.extui %12 : vector<16x128xi1> to vector<16x128xi32>
    %14 = arith.sitofp %13 : vector<16x128xi32> to vector<16x128xf32>
    %c0_9 = arith.constant 0 : index
    %c0_10 = arith.constant 0 : index
    %15 = vector.load %arg7[%c0_9, %c0_10] : memref<16x1xf32, #tpu.memory_space<vmem>>, vector<16x1xf32>
    %cst_11 = arith.constant dense<0xFF800000> : vector<16xf32>
    %16 = vector.multi_reduction <maximumf>, %7, %cst_11 [1] : vector<16x128xf32> to vector<16xf32>
    %17 = vector.shape_cast %16 : vector<16xf32> to vector<16x1xf32>
    %18 = arith.maximumf %15, %17 : vector<16x1xf32>
    %19 = arith.subf %15, %18 : vector<16x1xf32>
    %20 = math.exp %19 : vector<16x1xf32>
    %c0_12 = arith.constant 0 : index
    %c0_13 = arith.constant 0 : index
    %21 = vector.load %arg8[%c0_12, %c0_13] : memref<16x1xf32, #tpu.memory_space<vmem>>, vector<16x1xf32>
    %22 = arith.mulf %20, %21 : vector<16x1xf32>
    %23 = vector.broadcast %18 : vector<16x1xf32> to vector<16x128xf32>
    %24 = arith.subf %7, %23 : vector<16x128xf32>
    %25 = math.exp %24 : vector<16x128xf32>
    %cst_14 = arith.constant dense<0.000000e+00> : vector<16xf32>
    %26 = vector.multi_reduction <add>, %25, %cst_14 [1] : vector<16x128xf32> to vector<16xf32>
    %27 = vector.shape_cast %26 : vector<16xf32> to vector<16x1xf32>
    %28 = arith.addf %22, %27 : vector<16x1xf32>
    %c0_15 = arith.constant 0 : index
    %c0_16 = arith.constant 0 : index
    %29 = vector.load %arg8[%c0_15, %c0_16] : memref<16x1xf32, #tpu.memory_space<vmem>>, vector<16x1xf32>
    tpu.vector_store %arg8[%c0_15, %c0_16], %28 {strides = array<i32>} : memref<16x1xf32, #tpu.memory_space<vmem>>, vector<16x1xf32>,
    %c0_17 = arith.constant 0 : index
    %c0_18 = arith.constant 0 : index
    %30 = vector.load %arg7[%c0_17, %c0_18] : memref<16x1xf32, #tpu.memory_space<vmem>>, vector<16x1xf32>
    tpu.vector_store %arg7[%c0_17, %c0_18], %18 {strides = array<i32>} : memref<16x1xf32, #tpu.memory_space<vmem>>, vector<16x1xf32>,
    %c0_19 = arith.constant 0 : index
    %c0_20 = arith.constant 0 : index
    %31 = vector.load %arg9[%c0_19, %c0_20] : memref<16x1xf32, #tpu.memory_space<vmem>>, vector<16x1xf32>
    %cst_21 = arith.constant dense<0.000000e+00> : vector<16xf32>
    %32 = vector.multi_reduction <add>, %14, %cst_21 [1] : vector<16x128xf32> to vector<16xf32>
    %33 = vector.shape_cast %32 : vector<16xf32> to vector<16x1xf32>
    %34 = arith.addf %31, %33 : vector<16x1xf32>
    %c0_22 = arith.constant 0 : index
    %c0_23 = arith.constant 0 : index
    %35 = vector.load %arg9[%c0_22, %c0_23] : memref<16x1xf32, #tpu.memory_space<vmem>>, vector<16x1xf32>
    tpu.vector_store %arg9[%c0_22, %c0_23], %34 {strides = array<i32>} : memref<16x1xf32, #tpu.memory_space<vmem>>, vector<16x1xf32>,
    %c0_24 = arith.constant 0 : index
    %c0_25 = arith.constant 0 : index
    %36 = vector.load %arg10[%c0_24, %c0_25] : memref<16x1xf32, #tpu.memory_space<vmem>>, vector<16x1xf32>
    %37 = arith.mulf %14, %7 : vector<16x128xf32>
    %cst_26 = arith.constant dense<0.000000e+00> : vector<16xf32>
    %38 = vector.multi_reduction <add>, %37, %cst_26 [1] : vector<16x128xf32> to vector<16xf32>
    %39 = vector.shape_cast %38 : vector<16xf32> to vector<16x1xf32>
    %40 = arith.addf %36, %39 : vector<16x1xf32>
    %c0_27 = arith.constant 0 : index
    %c0_28 = arith.constant 0 : index
    %41 = vector.load %arg10[%c0_27, %c0_28] : memref<16x1xf32, #tpu.memory_space<vmem>>, vector<16x1xf32>
    tpu.vector_store %arg10[%c0_27, %c0_28], %40 {strides = array<i32>} : memref<16x1xf32, #tpu.memory_space<vmem>>, vector<16x1xf32>,
    %c0_i32_29 = arith.constant 0 : i32
    %42 = arith.cmpi eq, %arg1, %c0_i32_29 : i32
    %43 = arith.extui %42 : i1 to i32
    %c0_i32_30 = arith.constant 0 : i32
    %44 = arith.cmpi ne, %43, %c0_i32_30 : i32
    scf.if %44 {
      %c0_31 = arith.constant 0 : index
      %c0_32 = arith.constant 0 : index
      %45 = vector.load %arg4[%c0_31, %c0_32] : memref<16x32xbf16, #tpu.memory_space<vmem>>, vector<16x32xbf16>
      %46 = arith.extf %45 : vector<16x32xbf16> to vector<16x32xf32>
      %47 = arith.mulf %46, %46 : vector<16x32xf32>
      %cst_33 = arith.constant dense<0.000000e+00> : vector<16xf32>
      %48 = vector.multi_reduction <add>, %47, %cst_33 [1] : vector<16x32xf32> to vector<16xf32>
      %49 = vector.shape_cast %48 : vector<16xf32> to vector<16x1xf32>
      %cst_34 = arith.constant 14.2857141 : f32
      %50 = vector.broadcast %cst_34 : f32 to vector<16x1xf32>
      %51 = arith.mulf %49, %50 : vector<16x1xf32>
      %c0_35 = arith.constant 0 : index
      %c0_36 = arith.constant 0 : index
      %52 = vector.load %arg7[%c0_35, %c0_36] : memref<16x1xf32, #tpu.memory_space<vmem>>, vector<16x1xf32>
      %c0_37 = arith.constant 0 : index
      %c0_38 = arith.constant 0 : index
      %53 = vector.load %arg8[%c0_37, %c0_38] : memref<16x1xf32, #tpu.memory_space<vmem>>, vector<16x1xf32>
      %54 = arith.subf %51, %52 : vector<16x1xf32>
      %55 = math.exp %54 : vector<16x1xf32>
      %56 = arith.subf %53, %55 : vector<16x1xf32>
      %cst_39 = arith.constant 0.000000e+00 : f32
      %57 = vector.broadcast %cst_39 : f32 to vector<16x1xf32>
      %58 = arith.subf %57, %52 : vector<16x1xf32>
      %59 = math.exp %58 : vector<16x1xf32>
      %cst_40 = arith.constant 1.120000e+02 : f32
      %60 = vector.broadcast %cst_40 : f32 to vector<16x1xf32>
      %61 = arith.mulf %60, %59 : vector<16x1xf32>
      %62 = arith.subf %56, %61 : vector<16x1xf32>
      %cst_41 = arith.constant 9.99999991E-38 : f32
      %63 = vector.broadcast %cst_41 : f32 to vector<16x1xf32>
      %64 = arith.maximumf %62, %63 : vector<16x1xf32>
      %65 = math.log %64 : vector<16x1xf32>
      %66 = arith.addf %52, %65 : vector<16x1xf32>
      %c0_42 = arith.constant 0 : index
      %c0_43 = arith.constant 0 : index
      %67 = vector.load %arg9[%c0_42, %c0_43] : memref<16x1xf32, #tpu.memory_space<vmem>>, vector<16x1xf32>
      %cst_44 = arith.constant 1.000000e+00 : f32
      %68 = vector.broadcast %cst_44 : f32 to vector<16x1xf32>
      %69 = arith.subf %67, %68 : vector<16x1xf32>
      %c0_45 = arith.constant 0 : index
      %c0_46 = arith.constant 0 : index
      %70 = vector.load %arg10[%c0_45, %c0_46] : memref<16x1xf32, #tpu.memory_space<vmem>>, vector<16x1xf32>
      %cst_47 = arith.constant 1.000000e+00 : f32
      %71 = vector.broadcast %cst_47 : f32 to vector<16x1xf32>
      %72 = arith.mulf %71, %51 : vector<16x1xf32>
      %73 = arith.subf %70, %72 : vector<16x1xf32>
      %cst_48 = arith.constant 9.99999997E-7 : f32
      %74 = vector.broadcast %cst_48 : f32 to vector<16x1xf32>
      %75 = arith.cmpf olt, %69, %74 : vector<16x1xf32>
      %cst_49 = arith.constant 1.000000e+00 : f32
      %76 = vector.broadcast %cst_49 : f32 to vector<16x1xf32>
      %77 = arith.select %75, %76, %69 : vector<16x1xi1>, vector<16x1xf32>
      %78 = arith.mulf %66, %69 : vector<16x1xf32>
      %79 = arith.subf %73, %78 : vector<16x1xf32>
      %80 = arith.divf %79, %77 : vector<16x1xf32>
      %cst_50 = arith.constant -1.000000e+00 : f32
      %81 = vector.broadcast %cst_50 : f32 to vector<16x1xf32>
      %82 = arith.mulf %81, %80 : vector<16x1xf32>
      %c0_51 = arith.constant 0 : index
      %c0_52 = arith.constant 0 : index
      %83 = vector.load %arg6[%c0_51, %c0_52] : memref<16x1xf32, #tpu.memory_space<vmem>>, vector<16x1xf32>
      tpu.vector_store %arg6[%c0_51, %c0_52], %82 {strides = array<i32>} : memref<16x1xf32, #tpu.memory_space<vmem>>, vector<16x1xf32>,
    } else {
    }
    return
  }
  func.func @transform_0(%arg0: i32, %arg1: i32) -> (i32, i32) {
    %c0_i32 = arith.constant 0 : i32
    %c0_i32_0 = arith.constant 0 : i32
    return %arg0, %c0_i32 : i32, i32
  }
  func.func @transform_1(%arg0: i32, %arg1: i32) -> (i32, i32) {
    %c0_i32 = arith.constant 0 : i32
    %c0_i32_0 = arith.constant 0 : i32
    return %c0_i32, %arg1 : i32, i32
  }
  func.func @transform_2(%arg0: i32, %arg1: i32) -> (i32, i32) {
    %c0_i32 = arith.constant 0 : i32
    %c0_i32_0 = arith.constant 0 : i32
    return %arg0, %c0_i32 : i32, i32
  }
  func.func @transform_3(%arg0: i32, %arg1: i32) -> (i32, i32) {
    %c0_i32 = arith.constant 0 : i32
    %c0_i32_0 = arith.constant 0 : i32
    return %c0_i32, %arg1 : i32, i32
  }
  func.func @transform_4(%arg0: i32, %arg1: i32) -> (i32, i32) {
    %c0_i32 = arith.constant 0 : i32
    %c0_i32_0 = arith.constant 0 : i32
    return %arg0, %c0_i32 : i32, i32
  }
}

</mosaic_0001>

<llo_original>
// kernel: tpu_custom_call.1
$region0: #{tpu_custom_call.1}
  #allocation0 [shape = 'u32[]', space=smem, size = 0x4, offset = 0x4, fixed_abs, tag = 'smem constant byte address 0x4 - core index']
  #allocation1 [shape = 'u32[144,128]{1,0:T(1,128)}', space=vmem, size = 0x12000, scoped, tag = 'internal scratch']
  #allocation2 [shape = 'f32[16,1]{1,0:T(8,128)}', space=vmem, size = 0x2000, scoped, tag = 'scratch operand']
  #allocation3 [shape = 'f32[16,1]{1,0:T(8,128)}', space=vmem, size = 0x2000, scoped, tag = 'scratch operand']
  #allocation4 [shape = 'f32[16,1]{1,0:T(8,128)}', space=vmem, size = 0x2000, scoped, tag = 'scratch operand']
  #allocation5 [shape = 'f32[16,1]{1,0:T(8,128)}', space=vmem, size = 0x2000, scoped, tag = 'scratch operand']
  %s0 = inlined_call_operand.vmem [shape: s32[16,1], index: 0, kind: input, shape index: {}]
  %s1 = inlined_call_operand.vmem [shape: s32[1,128], index: 1, kind: input, shape index: {}]
  %s2 = inlined_call_operand.vmem [shape: bf16[16,32], index: 2, kind: input, shape index: {}]
  %s3 = inlined_call_operand.vmem [shape: bf16[32,128], index: 3, kind: input, shape index: {}]
  %s4 = inlined_call_operand.vmem [shape: f32[16,1], index: 4, kind: output, shape index: {}]
  %s5 = sld [smem:[#allocation0]]
  $region34: #{tpu_custom_call.1} parent=0
    _
  %s7 = ssub.s32 1, %s5
  %s8 = scalar_select 0, %s7, %s5
  // Predicated region
  $region2: #{tpu_custom_call.1} parent=0 // pred_check
    _
  $region3: #{tpu_custom_call.1} parent=0 // pred_check_branch
    %10 = sbr.rel (0) target = $region5
  $region4: #{tpu_custom_call.1} parent=0 // pred_region
    _
  $region5: #{tpu_custom_call.1} parent=0 // pred_fallthru
    _
  // Predicated region
  $region6: #{tpu_custom_call.1} parent=0 // pred_check
    _
  $region7: #{tpu_custom_call.1} parent=0 // pred_check_branch
    %12 = sbr.rel (0) target = $region9
  $region8: #{tpu_custom_call.1} parent=0 // pred_region
    _
  $region9: #{tpu_custom_call.1} parent=0 // pred_fallthru
    _
  // Predicated region
  $region10: #{tpu_custom_call.1} parent=0 // pred_check
    _
  $region11: #{tpu_custom_call.1} parent=0 // pred_check_branch
    %14 = sbr.rel (0) target = $region13
  $region12: #{tpu_custom_call.1} parent=0 // pred_region
    _
  $region13: #{tpu_custom_call.1} parent=0 // pred_fallthru
    _
  // Predicated region
  $region14: #{tpu_custom_call.1} parent=0 // pred_check
    _
  $region15: #{tpu_custom_call.1} parent=0 // pred_check_branch
    %16 = sbr.rel (0) target = $region17
  $region16: #{tpu_custom_call.1} parent=0 // pred_region
    _
  $region17: #{tpu_custom_call.1} parent=0 // pred_fallthru
    _
  %p18 = scmp.eq.s32.totalorder 0, 0
  // Predicated region
  $region18: #{tpu_custom_call.1} parent=0 // pred_check
    %p19 = pneg %p18
  $region19: #{tpu_custom_call.1} parent=0 // pred_check_branch
    %21 = sbr.rel (%p19) target = $region21
  $region20: #{tpu_custom_call.1} parent=0 // pred_region
    %vm22 = vcmask 7168
    %23 = vst.msk [vmem:[#allocation2] sm:$0xff] %vm22, -1e+30
    %24 = vst.msk [vmem:[#allocation2 + $0x8] sm:$0xff] %vm22, -1e+30
    %25 = vst.msk [vmem:[#allocation3] sm:$0xff] %vm22, 0.0
    %26 = vst.msk [vmem:[#allocation3 + $0x8] sm:$0xff] %vm22, 0.0
    %27 = vst.msk [vmem:[#allocation4] sm:$0xff] %vm22, 0.0
    %28 = vst.msk [vmem:[#allocation4 + $0x8] sm:$0xff] %vm22, 0.0
    %29 = vst.msk [vmem:[#allocation5] sm:$0xff] %vm22, 0.0
    %30 = vst.msk [vmem:[#allocation5 + $0x8] sm:$0xff] %vm22, 0.0
  $region21: #{tpu_custom_call.1} parent=0 // pred_fallthru
    _
  %v31 = vld [vmem:[%s2] sm:$0xf]
  %v32 = vld [vmem:[%s2 + $0x4] sm:$0xf]
  %v33 = vld [vmem:[%s3] sm:$0xf]
  %v34 = vld [vmem:[%s3 + $0x4] sm:$0xf]
  %v35 = vld [vmem:[%s3 + $0x8] sm:$0xf]
  %v36 = vld [vmem:[%s3 + $0xc] sm:$0xf]
  %v39 = vunpack.c.l.b16 %v31
  %v40 = vunpack.c.l.b16 %v32
  %v41 = vpack.c.b16 %v40, %v39
  %v46 = vunpack.c.l.b16 %v33
  %v47 = vunpack.c.l.b16 %v34
  %v48 = vunpack.c.l.b16 %v35
  %v49 = vunpack.c.l.b16 %v36
  %v50 = vpack.c.b16 %v47, %v46
  %v51 = vpack.c.b16 %v49, %v48
  %vm54 = vcmask 261120
  %v56 = vsel %vm54, %v41, 0
  %58 = vmatprep.subr.bf16.mxu0 0
  %59 = vmatpush1.bf16.msra.mxu0 %v50
  %60 = vmatprep.subr.bf16.mxu0 0
  %61 = vmatpush1.bf16.msra.mxu0 %v51
  %62 = vmatprep.subr.bf16.mxu0 0
  %63 = vmatpush1.bf16.msra.mxu0 0
  %64 = vmatprep.subr.bf16.mxu0 0
  %65 = vmatpush1.bf16.msra.mxu0 0
  %66 = vmatprep.subr.bf16.mxu0 0
  %67 = vmatpush1.bf16.msra.mxu0 0
  %68 = vmatprep.subr.bf16.mxu0 0
  %69 = vmatpush1.bf16.msra.mxu0 0
  %70 = vmatprep.subr.bf16.mxu0 0
  %71 = vmatpush1.bf16.msra.mxu0 0
  %72 = vmatprep.subr.bf16.mxu0 0
  %73 = vmatpush1.bf16.msra.mxu0 0
  %74 = vmatprep.subr.bf16.mxu0 0
  %75 = vmatpush1.bf16.msra.mxu0 0
  %76 = vmatprep.subr.bf16.mxu0 0
  %77 = vmatpush1.bf16.msra.mxu0 0
  %78 = vmatprep.subr.bf16.mxu0 0
  %79 = vmatpush1.bf16.msra.mxu0 0
  %80 = vmatprep.subr.bf16.mxu0 0
  %81 = vmatpush1.bf16.msra.mxu0 0
  %82 = vmatprep.subr.bf16.mxu0 0
  %83 = vmatpush1.bf16.msra.mxu0 0
  %84 = vmatprep.subr.bf16.mxu0 0
  %85 = vmatpush1.bf16.msra.mxu0 0
  %86 = vmatprep.subr.bf16.mxu0 0
  %87 = vmatpush1.bf16.msra.mxu0 0
  %88 = vmatprep.subr.bf16.mxu0 0
  %89 = vmatpush1.bf16.msra.mxu0 0
  %90 = vmatprep.mubr.bf16.mxu0 0
  %91 = vmatmul.mubr.bf16.gmra.mrb[0].mxu0 %v56
  %v92 = vpop.f32.mrb[0].mxu0
  %v93 = vadd.f32 0.0, %v92
  %v94 = vpop.f32.mrb[0].mxu0
  %v95 = vpop.f32.mrb[0].mxu0
  %v96 = vadd.f32 0.0, %v95
  %v97 = vpop.f32.mrb[0].mxu0
  %98 = vdwg.mxu0
  %v99 = vmul.f32 %v93, 14.285714
  %v100 = vmul.f32 %v96, 14.285714
  %v101 = vld [vmem:[%s0] sm:$0xff]
  %v102 = vld [vmem:[%s0 + $0x8] sm:$0xff]
  %v103 = vld [vmem:[%s1] sm:$0x1]
  %104 = vset.pattern.permute.xlu0 0
  %105 = vperm.xlu0 %104, %v101
  %v106 = vpop.permute.xlu0 %105
  %107 = vset.pattern.permute.xlu0 0
  %108 = vperm.xlu0 %107, %v102
  %v109 = vpop.permute.xlu0 %108
  %v110 = vlaneseq
  %v111 = vshrl.u32 %v110, 7
  %v112 = vsub.s32 0, %v111
  %v113 = vrot.slane %v103, %v112
  %vm114 = vcmp.eq.s32.totalorder %v106, %v113
  %vm115 = vcmp.eq.s32.totalorder %v109, %v113
  %v116 = vsel %vm114, 1, 0
  %v117 = vsel %vm115, 1, 0
  %v118 = vcvt.s32.f32 %v116
  %v119 = vcvt.s32.f32 %v117
  %v120 = vld [vmem:[#allocation2] sm:$0xff]
  %v121 = vld [vmem:[#allocation2 + $0x8] sm:$0xff]
  %122 = vmax.xlane.f32.xlu0 %v99
  %v123 = vpop.xlane.xlu0 %122
  %124 = vmax.xlane.f32.xlu0 %v100
  %v125 = vpop.xlane.xlu0 %124
  %v126 = vmax.f32 %v120, %v123
  %v127 = vmax.f32 %v121, %v125
  %v128 = vsub.f32 %v120, %v126
  %v129 = vsub.f32 %v121, %v127
  %v130 = vmul.f32 %v128, 1.442695
  %v131 = vpow.pop %v130
  %v132 = vmul.f32 %v129, 1.442695
  %v133 = vpow.pop %v132
  %v134 = vld [vmem:[#allocation3] sm:$0xff]
  %v135 = vld [vmem:[#allocation3 + $0x8] sm:$0xff]
  %v136 = vmul.f32 %v131, %v134
  %v137 = vmul.f32 %v133, %v135
  %139 = vset.pattern.permute.xlu0 0
  %140 = vperm.xlu0 %139, %v126
  %v141 = vpop.permute.xlu0 %140
  %144 = vset.pattern.permute.xlu0 0
  %145 = vperm.xlu0 %144, %v127
  %v146 = vpop.permute.xlu0 %145
  %v148 = vsub.f32 %v99, %v141
  %v149 = vsub.f32 %v100, %v146
  %v150 = vmul.f32 %v148, 1.442695
  %v151 = vpow.pop %v150
  %v152 = vmul.f32 %v149, 1.442695
  %v153 = vpow.pop %v152
  %154 = vadd.xlane.f32.xlu0 %v151
  %v155 = vpop.xlane.xlu0 %154
  %156 = vadd.xlane.f32.xlu0 %v153
  %v157 = vpop.xlane.xlu0 %156
  %v158 = vadd.f32 %v136, %v155
  %v159 = vadd.f32 %v137, %v157
  %vm160 = vcmask 7168
  %161 = vst.msk [vmem:[#allocation3] sm:$0xff] %vm160, %v158
  %162 = vst.msk [vmem:[#allocation3 + $0x8] sm:$0xff] %vm160, %v159
  %163 = vst.msk [vmem:[#allocation2] sm:$0xff] %vm160, %v126
  %164 = vst.msk [vmem:[#allocation2 + $0x8] sm:$0xff] %vm160, %v127
  %v165 = vld [vmem:[#allocation4] sm:$0xff]
  %v166 = vld [vmem:[#allocation4 + $0x8] sm:$0xff]
  %167 = vadd.xlane.f32.xlu0 %v118
  %v168 = vpop.xlane.xlu0 %167
  %169 = vadd.xlane.f32.xlu0 %v119
  %v170 = vpop.xlane.xlu0 %169
  %v171 = vadd.f32 %v165, %v168
  %v172 = vadd.f32 %v166, %v170
  %173 = vst.msk [vmem:[#allocation4] sm:$0xff] %vm160, %v171
  %174 = vst.msk [vmem:[#allocation4 + $0x8] sm:$0xff] %vm160, %v172
  %v175 = vld [vmem:[#allocation5] sm:$0xff]
  %v176 = vld [vmem:[#allocation5 + $0x8] sm:$0xff]
  %v177 = vmul.f32 %v118, %v99
  %v178 = vmul.f32 %v119, %v100
  %179 = vadd.xlane.f32.xlu0 %v177
  %v180 = vpop.xlane.xlu0 %179
  %181 = vadd.xlane.f32.xlu0 %v178
  %v182 = vpop.xlane.xlu0 %181
  %v183 = vadd.f32 %v175, %v180
  %v184 = vadd.f32 %v176, %v182
  %185 = vst.msk [vmem:[#allocation5] sm:$0xff] %vm160, %v183
  %186 = vst.msk [vmem:[#allocation5 + $0x8] sm:$0xff] %vm160, %v184
  // Predicated region
  $region22: #{tpu_custom_call.1} parent=0 // pred_check
    %p187 = pneg %p18
  $region23: #{tpu_custom_call.1} parent=0 // pred_check_branch
    %189 = sbr.rel (%p187) target = $region25
  $region24: #{tpu_custom_call.1} parent=0 // pred_region
    %v190 = vld [vmem:[%s2] sm:$0xf]
    %v191 = vld [vmem:[%s2 + $0x4] sm:$0xf]
    %v192 = vunpack.c.l.bf16 %v190
    %v193 = vunpack.c.l.bf16 %v191
    %v194 = vmul.f32 %v192, %v192
    %v195 = vmul.f32 %v193, %v193
    %v196 = vsel %vm54, %v194, 0.0
    %197 = vadd.xlane.f32.xlu0 %v196
    %v198 = vpop.xlane.xlu0 %197
    %v199 = vsel %vm54, %v195, 0.0
    %200 = vadd.xlane.f32.xlu0 %v199
    %v201 = vpop.xlane.xlu0 %200
    %v202 = vmul.f32 %v198, 14.285714
    %v203 = vmul.f32 %v201, 14.285714
    %v204 = vld [vmem:[#allocation2] sm:$0xff]
    %v205 = vld [vmem:[#allocation2 + $0x8] sm:$0xff]
    %v206 = vld [vmem:[#allocation3] sm:$0xff]
    %v207 = vld [vmem:[#allocation3 + $0x8] sm:$0xff]
    %v208 = vsub.f32 %v202, %v204
    %v209 = vsub.f32 %v203, %v205
    %v210 = vmul.f32 %v208, 1.442695
    %v211 = vpow.pop %v210
    %v212 = vmul.f32 %v209, 1.442695
    %v213 = vpow.pop %v212
    %v214 = vsub.f32 %v206, %v211
    %v215 = vsub.f32 %v207, %v213
    %v216 = vsub.f32 0.0, %v204
    %v217 = vsub.f32 0.0, %v205
    %v218 = vmul.f32 %v216, 1.442695
    %v219 = vpow.pop %v218
    %v220 = vmul.f32 %v217, 1.442695
    %v221 = vpow.pop %v220
    %v222 = vmul.f32 %v219, 112.0
    %v223 = vmul.f32 %v221, 112.0
    %v224 = vsub.f32 %v214, %v222
    %v225 = vsub.f32 %v215, %v223
    %v226 = vmax.f32 %v224, 1e-37
    %v227 = vmax.f32 %v225, 1e-37
    %v228 = vlog2.pop %v226
    %v229 = vmul.f32 %v228, 0.6931472
    %v230 = vlog2.pop %v227
    %v231 = vmul.f32 %v230, 0.6931472
    %v232 = vadd.f32 %v204, %v229
    %v233 = vadd.f32 %v205, %v231
    %v234 = vld [vmem:[#allocation4] sm:$0xff]
    %v235 = vld [vmem:[#allocation4 + $0x8] sm:$0xff]
    %v236 = vsub.f32 %v234, 1.0
    %v237 = vsub.f32 %v235, 1.0
    %v238 = vld [vmem:[#allocation5] sm:$0xff]
    %v239 = vld [vmem:[#allocation5 + $0x8] sm:$0xff]
    %v240 = vsub.f32 %v238, %v202
    %v241 = vsub.f32 %v239, %v203
    %vm242 = vcmp.lt.f32.partialorder %v236, 1e-06
    %vm243 = vcmp.lt.f32.partialorder %v237, 1e-06
    %v244 = vsel %vm242, 1.0, %v236
    %v245 = vsel %vm243, 1.0, %v237
    %v246 = vmul.f32 %v232, %v236
    %v247 = vmul.f32 %v233, %v237
    %v248 = vsub.f32 %v240, %v246
    %v249 = vsub.f32 %v241, %v247
    %v250 = vrcp.pop %v244
    %v251 = vmul.f32 %v248, %v250
    %v252 = vrcp.pop %v245
    %v253 = vmul.f32 %v249, %v252
    %v254 = vmul.f32 %v251, -1.0
    %v255 = vmul.f32 %v253, -1.0
    %256 = vst.msk [vmem:[%s4] sm:$0xff] %vm160, %v254
    %257 = vst.msk [vmem:[%s4 + $0x8] sm:$0xff] %vm160, %v255
  $region25: #{tpu_custom_call.1} parent=0 // pred_fallthru
    _
  // Predicated region
  $region26: #{tpu_custom_call.1} parent=0 // pred_check
    _
  $region27: #{tpu_custom_call.1} parent=0 // pred_check_branch
    %259 = sbr.rel (0) target = $region29
  $region28: #{tpu_custom_call.1} parent=0 // pred_region
    _
  $region29: #{tpu_custom_call.1} parent=0 // pred_fallthru
    _
  // Predicated region
  $region30: #{tpu_custom_call.1} parent=0 // pred_check
    _
  $region31: #{tpu_custom_call.1} parent=0 // pred_check_branch
    %261 = sbr.rel (0) target = $region33
  $region32: #{tpu_custom_call.1} parent=0 // pred_region
    _
  $region33: #{tpu_custom_call.1} parent=0 // pred_fallthru
    _

</llo_original>
